<compile_context>
chip_gen: v5e
topology: v5e:2x2
jax: 0.10.0
libtpu: 0.0.40
codegen_flags: <defaults>
</compile_context>

<pallas_src>
import math

import jax
import jax.numpy as jnp
from jax import lax
from jax.experimental import pallas as pl
from jax.experimental.pallas import tpu as pltpu


def _round_up(x, m):
    return (x + m - 1) // m * m


_VMEM_LIMIT_CACHE = None


def _vmem_limit_bytes():
    """Generation-aware scoped-VMEM budget (half of physical, capped at 64 MiB)."""
    global _VMEM_LIMIT_CACHE
    if _VMEM_LIMIT_CACHE is None:
        cap = 64 * 1024 * 1024
        try:
            info = pltpu.get_tpu_info()
            cap = int(getattr(info, "vmem_capacity_bytes", cap))
        except Exception:
            pass
        _VMEM_LIMIT_CACHE = max(16 * 1024 * 1024, min(cap // 2, 64 * 1024 * 1024))
    return _VMEM_LIMIT_CACHE


def _pick_point_tile(n, target, batch):
    """Lane-axis tile: whole axis when it fits, else a multiple of 128.  When batch==1
    split into >=2 tiles so both v7x TensorCores get a parallel grid unit."""
    if n <= target:
        if batch == 1 and n > 256:
            return min(target, max(128, _round_up(pl.cdiv(n, 2), 128)))
        return n
    return target


# -----------------------------------------------------------------------------
# Pallas kernels
# -----------------------------------------------------------------------------
def _cf_linear_relu_kernel(x_ref, w_ref, b_ref, o_ref):
    # x: (1, Cin, tn)  w: (Cout, Cin)  b: (Cout, 1)  o: (1, Cout, tn)
    y = jnp.dot(w_ref[...], x_ref[0], preferred_element_type=jnp.float32)
    o_ref[0] = jnp.maximum(y + b_ref[...], 0.0)


def _cf_linear2_relu_mul_kernel(x_ref, w1_ref, b1_ref, w2_ref, b2_ref, m_ref, o_ref):
    # relu(bn2(W2 @ relu(bn1(W1 @ x)))) * m   — the (Cmid, tn) intermediate stays on-chip.
    h = jnp.dot(w1_ref[...], x_ref[0], preferred_element_type=jnp.float32)
    h = jnp.maximum(h + b1_ref[...], 0.0)
    y = jnp.dot(w2_ref[...], h, preferred_element_type=jnp.float32)
    o_ref[0] = jnp.maximum(y + b2_ref[...], 0.0) * m_ref[0]


def _sqdist_kernel(a_ref, b_ref, o_ref):
    # a: (1, D, tn)  b: (1, D, tm)  o: (1, tn, tm)
    # dist = |a|^2 + |b|^2 - 2 a.b, folded into one augmented matmul:
    #   [-2a; aa; 1]^T @ [b; 1; bb]   (norms computed in-kernel from the loaded tiles)
    a = a_ref[0]
    b = b_ref[0]
    aa = jnp.sum(a * a, axis=0, keepdims=True)          # (1, tn)
    bb = jnp.sum(b * b, axis=0, keepdims=True)          # (1, tm)
    a_aug = jnp.concatenate([a * -2.0, aa, jnp.ones_like(aa)], axis=0)   # (D+2, tn)
    b_aug = jnp.concatenate([b, jnp.ones_like(bb), bb], axis=0)          # (D+2, tm)
    o_ref[0] = lax.dot_general(a_aug, b_aug, (((0,), (0,)), ((), ())),
                               preferred_element_type=jnp.float32)


def _down_tail_kernel(gf_ref, w1_ref, b1_ref, w2_ref, b2_ref, o_ref):
    # gf: (1, k, Cin, ts)  w1: (Cout, Cin)  w2: (Cout, Cout)  b*: (Cout, 1)  o: (1, Cout, ts)
    k = gf_ref.shape[1]
    g = None
    for kk in range(k):                       # static unroll, k == 8
        y = jnp.dot(w1_ref[...], gf_ref[0, kk],
                    preferred_element_type=jnp.float32)        # (Cout, ts)
        y = jnp.maximum(y + b1_ref[...], 0.0)                  # conv -> bn -> relu
        g = y if g is None else jnp.maximum(g, y)              # running max over k
    out = jnp.dot(w2_ref[...], g, preferred_element_type=jnp.float32)
    o_ref[0] = jnp.maximum(out + b2_ref[...], 0.0)             # fc3 -> bn3 -> relu


# -----------------------------------------------------------------------------
# Pallas wrappers
# -----------------------------------------------------------------------------
def cf_linear_bn_relu(x_bcn, w, b, scale, shift, tn_target=8192):
    """relu(bn(W x + b)), channels-first.  x: (B, Cin, N) -> (B, Cout, N)."""
    B, Cin, N = x_bcn.shape
    Cout = w.shape[1]
    w_t = (w * scale[None, :]).T                         # BN folded into weights
    b_c = (b * scale + shift).reshape(Cout, 1)

    tn = _pick_point_tile(N, tn_target, B)
    grid = (B, pl.cdiv(N, tn))
    cp = pltpu.CompilerParams(dimension_semantics=("parallel", "parallel"),
                              vmem_limit_bytes=_vmem_limit_bytes())
    return pl.pallas_call(
        _cf_linear_relu_kernel,
        out_shape=jax.ShapeDtypeStruct((B, Cout, N), jnp.float32),
        grid=grid,
        in_specs=[pl.BlockSpec((1, Cin, tn), lambda bi, j: (bi, 0, j)),
                  pl.BlockSpec((Cout, Cin), lambda bi, j: (0, 0)),
                  pl.BlockSpec((Cout, 1), lambda bi, j: (0, 0))],
        out_specs=pl.BlockSpec((1, Cout, tn), lambda bi, j: (bi, 0, j)),
        compiler_params=cp,
    )(x_bcn, w_t, b_c)


def cf_linear2_bn_relu_mul(x_bcn, w1, b1, s1, sh1, w2, b2, s2, sh2, mul, tn_target=8192):
    """relu(bn2(fc2(relu(bn1(fc1(x)))))) * mul in ONE kernel, channels-first."""
    B, Cin, N = x_bcn.shape
    Cmid = w1.shape[1]
    Cout = w2.shape[1]
    w1t = (w1 * s1[None, :]).T
    b1c = (b1 * s1 + sh1).reshape(Cmid, 1)
    w2t = (w2 * s2[None, :]).T
    b2c = (b2 * s2 + sh2).reshape(Cout, 1)

    tn = _pick_point_tile(N, tn_target, B)
    grid = (B, pl.cdiv(N, tn))
    cp = pltpu.CompilerParams(dimension_semantics=("parallel", "parallel"),
                              vmem_limit_bytes=_vmem_limit_bytes())
    return pl.pallas_call(
        _cf_linear2_relu_mul_kernel,
        out_shape=jax.ShapeDtypeStruct((B, Cout, N), jnp.float32),
        grid=grid,
        in_specs=[pl.BlockSpec((1, Cin, tn), lambda bi, j: (bi, 0, j)),
                  pl.BlockSpec((Cmid, Cin), lambda bi, j: (0, 0)),
                  pl.BlockSpec((Cmid, 1), lambda bi, j: (0, 0)),
                  pl.BlockSpec((Cout, Cmid), lambda bi, j: (0, 0)),
                  pl.BlockSpec((Cout, 1), lambda bi, j: (0, 0)),
                  pl.BlockSpec((1, Cout, tn), lambda bi, j: (bi, 0, j))],
        out_specs=pl.BlockSpec((1, Cout, tn), lambda bi, j: (bi, 0, j)),
        compiler_params=cp,
    )(x_bcn, w1t, b1c, w2t, b2c, mul)


def pairwise_sqdist_cf(a_bdn, b_bdm, tr_target=512, tc_target=1024):
    """Squared distances.  a: (B, D, N), b: (B, D, M), both channels-first -> (B, N, M)."""
    B, D, N = a_bdn.shape
    M = b_bdm.shape[2]
    tr = N if N <= tr_target else tr_target          # output sublane tile
    tc = M if M <= tc_target else tc_target          # output lane tile (lane-dense)
    grid = (B, pl.cdiv(N, tr), pl.cdiv(M, tc))
    return pl.pallas_call(
        _sqdist_kernel,
        out_shape=jax.ShapeDtypeStruct((B, N, M), jnp.float32),
        grid=grid,
        in_specs=[pl.BlockSpec((1, D, tr), lambda bi, i, j: (bi, 0, i)),
                  pl.BlockSpec((1, D, tc), lambda bi, i, j: (bi, 0, j))],
        out_specs=pl.BlockSpec((1, tr, tc), lambda bi, i, j: (bi, i, j)),
        compiler_params=pltpu.CompilerParams(
            dimension_semantics=("parallel", "parallel", "parallel"),
            vmem_limit_bytes=_vmem_limit_bytes()),
    )(a_bdn, b_bdm)


def fused_downsample_tail(gf_bkcs, w1, b1, s1, sh1, w2, b2, s2, sh2, ts_target=2048):
    """relu(bn3(fc3( max_k relu(bn(conv(gf))) ))), gf: (B, k, Cin, S) -> (B, Cout, S)."""
    B, k, Cin, S = gf_bkcs.shape
    Cout = w1.shape[1]
    w1t = (w1 * s1[None, :]).T
    b1c = (b1 * s1 + sh1).reshape(Cout, 1)
    w2t = (w2 * s2[None, :]).T
    b2c = (b2 * s2 + sh2).reshape(Cout, 1)

    # Cap ts so the (Cout, ts) running max + one matmul result stay ~half the vreg file.
    ts_cap = max(128, (16384 // max(Cout, 1)) // 128 * 128)
    ts = _pick_point_tile(S, min(ts_target, ts_cap), B)
    grid = (B, pl.cdiv(S, ts))

    return pl.pallas_call(
        _down_tail_kernel,
        out_shape=jax.ShapeDtypeStruct((B, Cout, S), jnp.float32),
        grid=grid,
        in_specs=[pl.BlockSpec((1, k, Cin, ts), lambda bi, j: (bi, 0, 0, j)),
                  pl.BlockSpec((Cout, Cin), lambda bi, j: (0, 0)),
                  pl.BlockSpec((Cout, 1), lambda bi, j: (0, 0)),
                  pl.BlockSpec((Cout, Cout), lambda bi, j: (0, 0)),
                  pl.BlockSpec((Cout, 1), lambda bi, j: (0, 0))],
        out_specs=pl.BlockSpec((1, Cout, ts), lambda bi, j: (bi, 0, j)),
        compiler_params=pltpu.CompilerParams(
            dimension_semantics=("parallel", "parallel"),
            vmem_limit_bytes=_vmem_limit_bytes()),
    )(gf_bkcs, w1t, b1c, w2t, b2c)


# -----------------------------------------------------------------------------
# Glue (index manipulation / data-dependent ops kept in plain JAX)
# -----------------------------------------------------------------------------
def bknn(xyz2d, k, row_chunk=2048):
    """kNN indices (B, N, k) from channels-first coords (B, D, N).  For large N the
    query rows are processed in chunks so the full (N, N) matrix never lives in HBM."""
    B, D, N = xyz2d.shape
    if N <= row_chunk:
        return lax.top_k(-pairwise_sqdist_cf(xyz2d, xyz2d), k)[1]
    Np = _round_up(N, row_chunk)
    q = xyz2d if Np == N else jnp.pad(xyz2d, ((0, 0), (0, 0), (0, Np - N)))
    q = jnp.moveaxis(q.reshape(B, D, Np // row_chunk, row_chunk), 2, 0)   # (nc, B, D, rc)

    def chunk_fn(qc):                                    # qc: (B, D, rc)
        return lax.top_k(-pairwise_sqdist_cf(qc, xyz2d), k)[1]

    idx = lax.map(chunk_fn, q)                           # (nc, B, rc, k)
    return jnp.moveaxis(idx, 0, 1).reshape(B, Np, k)[:, :N]


def affine_laplacian_cf(feat_bfn, knn_idx, affine_w, affine_b):
    """AffineGeometry: getLaplacian + Conv1d(k,1,1) + .view(B,N,F), but the output is
    produced channels-first (B, F, N) directly (exact flat-index replica of the torch
    (F, N*k).view(k, N*F) reshuffle) so no HBM transpose is needed afterwards."""
    B, Fdim, N = feat_bfn.shape
    k = knn_idx.shape[-1]
    r = jnp.arange(k, dtype=jnp.int32)[:, None, None]
    fprime = jnp.arange(Fdim, dtype=jnp.int32)[None, :, None]
    nprime = jnp.arange(N, dtype=jnp.int32)[None, None, :]
    T = r * (N * Fdim) + nprime * Fdim + fprime          # flat idx in the viewed array
    f_src = T // (N * k)
    rem = T % (N * k)
    n_src = rem // k
    j_src = rem % k                                      # (k, F, N) each
    barr = jnp.arange(B)[:, None, None, None]
    pt_idx = knn_idx[barr, n_src[None], j_src[None]]     # (B, k, F, N)
    lap_cf = feat_bfn[barr, f_src[None], pt_idx]         # (B, k, F, N)
    return jnp.einsum('bkfn,k->bfn', lap_cf, affine_w) + affine_b


def farthest_point_sample(xyz_bn3, npoint):
    B, N, _ = xyz_bn3.shape

    def body(i, carry):
        centroids, distance, farthest = carry
        centroids = centroids.at[:, i].set(farthest)
        centroid = xyz_bn3[jnp.arange(B), farthest][:, None, :]    # (B, 1, 3)
        dist = jnp.sum((xyz_bn3 - centroid) ** 2, axis=-1)         # (B, N)
        distance = jnp.minimum(distance, dist)
        farthest = jnp.argmax(distance, axis=-1).astype(jnp.int32)
        return centroids, distance, farthest

    init = (jnp.zeros((B, npoint), jnp.int32),
            jnp.full((B, N), 1e10, jnp.float32),
            jnp.zeros((B,), jnp.int32))
    centroids, _, _ = lax.fori_loop(0, npoint, body, init)
    return centroids


def query_ball_point(radius, nsample, sqrdists):
    B, S, N = sqrdists.shape
    idx = jnp.broadcast_to(jnp.arange(N, dtype=jnp.int32), (B, S, N))
    idx = jnp.where(sqrdists > radius ** 2, N, idx)
    idx = jnp.sort(idx, axis=-1)[:, :, :nsample]
    first = idx[:, :, :1]
    return jnp.where(idx == N, jnp.broadcast_to(first, idx.shape), idx)


# -----------------------------------------------------------------------------
# Parameters (deterministic init, shapes taken from the nn.Module __init__)
# -----------------------------------------------------------------------------
def init_params(key, in_channel, out_channel, k_walk=8):
    bnsize = int(math.ceil(in_channel / 2))

    def lin(kk, fan_in, fan_out):
        bound = 1.0 / math.sqrt(fan_in)
        kw, kb = jax.random.split(kk)
        w = jax.random.uniform(kw, (fan_in, fan_out), jnp.float32, -bound, bound)
        b = jax.random.uniform(kb, (fan_out,), jnp.float32, -bound, bound)
        return w, b

    def bn(c, eps=1e-5):
        gamma = jnp.ones((c,), jnp.float32)
        beta = jnp.zeros((c,), jnp.float32)
        mean = jnp.zeros((c,), jnp.float32)
        var = jnp.ones((c,), jnp.float32)
        scale = gamma / jnp.sqrt(var + eps)
        shift = beta - mean * scale
        return scale, shift

    keys = jax.random.split(key, 6)
    p = {}
    p['fc1_w'], p['fc1_b'] = lin(keys[0], in_channel, bnsize)
    p['bn1_scale'], p['bn1_shift'] = bn(bnsize)
    aw, ab = lin(keys[1], k_walk, 1)                    # Conv1d(k, 1, 1)
    p['affine_w'], p['affine_b'] = aw[:, 0], ab[0]
    p['transform_w'], p['transform_b'] = lin(keys[2], bnsize, bnsize)
    p['walk_bn_scale'], p['walk_bn_shift'] = bn(bnsize)
    p['fc2_w'], p['fc2_b'] = lin(keys[3], bnsize, in_channel)
    p['bn2_scale'], p['bn2_shift'] = bn(in_channel)
    p['dconv_w'], p['dconv_b'] = lin(keys[4], in_channel, out_channel)  # ConvBNReLU1D
    p['dbn_scale'], p['dbn_shift'] = bn(out_channel)
    p['fc3_w'], p['fc3_b'] = lin(keys[5], out_channel, out_channel)
    p['bn3_scale'], p['bn3_shift'] = bn(out_channel)
    return p, bnsize


# -----------------------------------------------------------------------------
# downWalkBlock.forward
# -----------------------------------------------------------------------------
def down_walk_block(params, xyz, feat, out_point, radius):
    p = params
    B, _, N = xyz.shape
    k = 8

    # fc1 -> bn1 -> relu   (channels-first: points on lanes, BN folded into W)
    x = cf_linear_bn_relu(feat, p['fc1_w'], p['fc1_b'],
                          p['bn1_scale'], p['bn1_shift'])             # (B, bnsize, N)

    # walk2 : AffineGeometry.  kNN on the xy coords, laplacian gather + Conv1d(k,1,1)
    # emitted channels-first, then transform->bn->relu FUSED with fc2->bn2->relu->*feat.
    knn_idx = bknn(xyz[:, 0:2, :], k)                                 # (B, N, k)
    aff_cf = affine_laplacian_cf(x, knn_idx,
                                 p['affine_w'], p['affine_b'])        # (B, bnsize, N)
    x = cf_linear2_bn_relu_mul(aff_cf,
                               p['transform_w'], p['transform_b'],
                               p['walk_bn_scale'], p['walk_bn_shift'],
                               p['fc2_w'], p['fc2_b'],
                               p['bn2_scale'], p['bn2_shift'],
                               mul=feat)                              # (B, Cin, N)

    # downsampleBlock
    xyz_n3 = jnp.transpose(xyz, (0, 2, 1))                            # (B, N, 3)
    # TODO(synk): pointnet2_utils.sample_and_groupfeat is external / undefined in the
    # source; re-implemented as FPS (deterministic start idx 0) + ball-query grouping.
    fps_idx = farthest_point_sample(xyz_n3, out_point)                # (B, S)
    new_xyz = xyz_n3[jnp.arange(B)[:, None], fps_idx]                 # (B, S, 3)
    new_xyz_cf = jnp.transpose(new_xyz, (0, 2, 1))                    # (B, 3, S) tiny
    sqrdists = pairwise_sqdist_cf(new_xyz_cf, xyz)                    # (B, S, N)
    group_idx = query_ball_point(radius, k, sqrdists)                 # (B, S, k)

    Cin = x.shape[1]
    gidx_ks = jnp.transpose(group_idx, (0, 2, 1))                     # (B, k, S) tiny
    gf = x[jnp.arange(B)[:, None, None, None],
           jnp.arange(Cin)[None, None, :, None],
           gidx_ks[:, :, None, :]]                                    # (B, k, Cin, S)

    # dconv -> bn -> relu -> max over k -> fc3 -> bn3 -> relu : ONE fused kernel
    out = fused_downsample_tail(gf, p['dconv_w'], p['dconv_b'],
                                p['dbn_scale'], p['dbn_shift'],
                                p['fc3_w'], p['fc3_b'],
                                p['bn3_scale'], p['bn3_shift'])       # (B, Cout, S)
    return new_xyz, out


if __name__ == "__main__":
    key = jax.random.PRNGKey(0)
    B, N, S = 2, 16, 8
    in_channel, out_channel, radius = 8, 16, 1.0

    kxyz, kfeat, kparams = jax.random.split(key, 3)
    xyz = jax.random.normal(kxyz, (B, 3, N), jnp.float32)
    feat = jax.random.normal(kfeat, (B, in_channel, N), jnp.float32)

    params, bnsize = init_params(kparams, in_channel, out_channel)
    new_xyz, out = down_walk_block(params, xyz, feat, out_point=S, radius=radius)
    jax.block_until_ready((new_xyz, out))

    assert new_xyz.shape == (B, S, 3), new_xyz.shape
    assert out.shape == (B, out_channel, S), out.shape
    assert bool(jnp.all(jnp.isfinite(new_xyz))) and bool(jnp.all(jnp.isfinite(out)))
    print("KERNEL_OK")
</pallas_src>

<mosaic_0001>
module attributes {stable_mosaic.version = 11 : i64} {
  func.func @_cf_linear_relu_kernel(%arg0: i32, %arg1: i32, %arg2: memref<1x8x16xf32, #tpu.memory_space<vmem>>, %arg3: memref<4x8xf32, #tpu.memory_space<vmem>>, %arg4: memref<4x1xf32, #tpu.memory_space<vmem>>, %arg5: memref<1x4x16xf32, #tpu.memory_space<vmem>>) attributes {dimension_semantics = [#tpu.dimension_semantics<parallel>, #tpu.dimension_semantics<parallel>], iteration_bounds = array<i64: 2, 1>, scalar_prefetch = 0 : i64, scratch_operands = 0 : i64, tpu.core_type = #tpu.core_type<tc>, window_params = [{transform_indices = @transform_0, window_bounds = array<i64: 1, 8, 16>}, {pipeline_mode = #tpu.pipeline_mode<synchronous>, transform_indices = @transform_1, window_bounds = array<i64: 4, 8>}, {pipeline_mode = #tpu.pipeline_mode<synchronous>, transform_indices = @transform_2, window_bounds = array<i64: 4, 1>}, {transform_indices = @transform_3, window_bounds = array<i64: 1, 4, 16>}]} {
    %c0 = arith.constant 0 : index
    %c0_0 = arith.constant 0 : index
    %0 = vector.load %arg3[%c0, %c0_0] : memref<4x8xf32, #tpu.memory_space<vmem>>, vector<4x8xf32>
    %c0_1 = arith.constant 0 : index
    %c0_2 = arith.constant 0 : index
    %c0_3 = arith.constant 0 : index
    %1 = vector.load %arg2[%c0_1, %c0_2, %c0_3] : memref<1x8x16xf32, #tpu.memory_space<vmem>>, vector<1x8x16xf32>
    %2 = vector.shape_cast %1 : vector<1x8x16xf32> to vector<8x16xf32>
    %cst = arith.constant dense<0.000000e+00> : vector<4x16xf32>
    %3 = tpu.matmul %0, %2, %cst {dimension_numbers = #tpu.dot_dimension_numbers<[1], [0], [0], [1], [0, 0, 1, 1], [], []>} : vector<4x8xf32>, vector<8x16xf32>, vector<4x16xf32> -> vector<4x16xf32>
    %c0_4 = arith.constant 0 : index
    %c0_5 = arith.constant 0 : index
    %4 = vector.load %arg4[%c0_4, %c0_5] : memref<4x1xf32, #tpu.memory_space<vmem>>, vector<4x1xf32>
    %5 = vector.broadcast %4 : vector<4x1xf32> to vector<4x16xf32>
    %6 = arith.addf %3, %5 : vector<4x16xf32>
    %cst_6 = arith.constant 0.000000e+00 : f32
    %7 = vector.broadcast %cst_6 : f32 to vector<4x16xf32>
    %8 = arith.maximumf %6, %7 : vector<4x16xf32>
    %c0_7 = arith.constant 0 : index
    %c0_8 = arith.constant 0 : index
    %c0_9 = arith.constant 0 : index
    %9 = vector.load %arg5[%c0_7, %c0_8, %c0_9] : memref<1x4x16xf32, #tpu.memory_space<vmem>>, vector<1x4x16xf32>
    %10 = vector.shape_cast %9 : vector<1x4x16xf32> to vector<4x16xf32>
    %11 = vector.shape_cast %8 : vector<4x16xf32> to vector<1x4x16xf32>
    tpu.vector_store %arg5[%c0_7, %c0_8, %c0_9], %11 {strides = array<i32>} : memref<1x4x16xf32, #tpu.memory_space<vmem>>, vector<1x4x16xf32>,
    return
  }
  func.func @transform_0(%arg0: i32, %arg1: i32) -> (i32, i32, i32) {
    %c0_i32 = arith.constant 0 : i32
    %c0_i32_0 = arith.constant 0 : i32
    return %arg0, %c0_i32, %arg1 : i32, i32, i32
  }
  func.func @transform_1(%arg0: i32, %arg1: i32) -> (i32, i32) {
    %c0_i32 = arith.constant 0 : i32
    %c0_i32_0 = arith.constant 0 : i32
    %c0_i32_1 = arith.constant 0 : i32
    return %c0_i32, %c0_i32_0 : i32, i32
  }
  func.func @transform_2(%arg0: i32, %arg1: i32) -> (i32, i32) {
    %c0_i32 = arith.constant 0 : i32
    %c0_i32_0 = arith.constant 0 : i32
    %c0_i32_1 = arith.constant 0 : i32
    return %c0_i32, %c0_i32_0 : i32, i32
  }
  func.func @transform_3(%arg0: i32, %arg1: i32) -> (i32, i32, i32) {
    %c0_i32 = arith.constant 0 : i32
    %c0_i32_0 = arith.constant 0 : i32
    return %arg0, %c0_i32, %arg1 : i32, i32, i32
  }
}

</mosaic_0001>

<llo_original>
// kernel: tpu_custom_call.1
$region0: #{tpu_custom_call.1}
  #allocation0 [shape = 'u32[]', space=smem, size = 0x4, offset = 0x4, fixed_abs, tag = 'smem constant byte address 0x4 - core index']
  #allocation1 [shape = 'u32[72,128]{1,0:T(1,128)}', space=vmem, size = 0x9000, scoped, tag = 'internal scratch']
  %s0 = inlined_call_operand.hbm [shape: f32[2,8,16], index: 0, kind: input, shape index: {}]
  %s1 = inlined_call_operand.vmem [shape: f32[4,8], index: 1, kind: input, shape index: {}]
  %s2 = inlined_call_operand.vmem [shape: f32[4,1], index: 2, kind: input, shape index: {}]
  %s3 = inlined_call_operand.hbm [shape: f32[2,4,16], index: 3, kind: output, shape index: {}]
  %s4 = sld [smem:[#allocation0]]
  $region49: #{tpu_custom_call.1} parent=0
    _
  %s6 = ssub.s32 1, %s4
  %s7 = scalar_select 0, %s6, %s4
  $region1: #{tpu_custom_call.1} parent=0
    #allocation2 [shape = 'u8[8192]{0}', space=vmem, size = 0x2000, scoped, tag = 'input window, operand 0']
    #allocation3 [shape = 's32[2]{0}', space=sflag, size = 0x8, scoped, tag = 'scoped memory for tpu_custom_call.1']
    #allocation4 [shape = 's32[2]{0}', space=sflag, size = 0x8, scoped, tag = 'scoped memory for tpu_custom_call.1']
    #allocation5 [shape = 'u8[4096]{0}', space=vmem, size = 0x1000, scoped, tag = 'output window, operand 0']
    %8 = vsyncpa [#allocation3], 0
    %s9 = scalar_lea.sflag [#allocation3], 1
    %10 = vsyncpa %s9, 0
    %11 = vsyncpa [#allocation4], 0
    %s12 = scalar_lea.sflag [#allocation4], 1
    %13 = vsyncpa %s12, 0
    loop: start=0, step=1, limit=4
    $region2: #{tpu_custom_call.1} parent=1 // loop_pre_header
      _
    $region3: #{tpu_custom_call.1} parent=1 // loop_header
      %s15 = sphi 0, %s19
      %p16 = scmp.ge.s32.totalorder %s15, 4
      %s22 = sphi 0, %s34
      %s23 = sphi 0, %s30
      %s24 = sphi 0, %s22
      %s25 = sphi 0, %s23
      %s26 = sphi 0, %s24
      %s27 = sphi 0, %s25
      %s39 = sphi 0, %s41
      %s42 = sphi 0, %s39
      %s43 = sphi 0, %s42
      %s59 = sphi 0, %s43
      %s63 = sphi 0, %s63
      %s65 = sphi 0, %s63
      %s66 = sphi 0, %s65
      %s80 = sphi 0, %s66
      %s84 = sphi 0, %s84
      %s86 = sphi 0, %s84
      %s87 = sphi 0, %s86
      %s101 = sphi 0, %s87
      %s109 = sphi 0, %s111
      %s112 = sphi 0, %s109
      %s113 = sphi 0, %s112
      %s129 = sphi 0, %s113
    $region4: #{tpu_custom_call.1} parent=1 // loop_header_branch
      %18 = sbr.rel (%p16) target = $region8
    $region5: #{tpu_custom_call.1} parent=1 // loop_body
      %s20 = ssub.s32 %s15, 1
      %s21 = ssub.s32 %s15, 2
      %s28 = sadd.s32 1, %s23
      %p29 = scmp.ge.s32.totalorder %s28, 1
      %s30 = scalar_select %p29, 0, %s28
      %s31 = sadd.s32 1, %s22
      %s32 = scalar_select %p29, %s31, %s22
      %p33 = scmp.ge.s32.totalorder %s32, 2
      %s34 = scalar_select %p33, 0, %s32
      %s35 = ssub.s32 %s22, %s34
      %s36 = ssub.s32 %s23, %s30
      %s37 = sor.u32 %s35, %s36
      %p38 = scmp.eq.s32.totalorder %s37, 0
      %s40 = sadd.s32 %s39, 1
      %s41 = scalar_select %p38, %s39, %s40
      %p44 = pneg %p38
      %p45 = scmp.eq.s32.totalorder %s15, 1
      %p46 = por %p44, %p45
      %p47 = scmp.ne.s32.totalorder %s39, %s42
      %p48 = scmp.eq.s32.totalorder %s15, 0
      %p49 = por %p47, %p48
      %p50 = scmp.ne.s32.totalorder %s39, %s42
      %p51 = scmp.eq.s32.totalorder %s20, 1
      %p52 = por %p50, %p51
      %p53 = scmp.ne.s32.totalorder %s42, %s43
      %p54 = scmp.eq.s32.totalorder %s20, 0
      %p55 = por %p53, %p54
      %p56 = scmp.ne.s32.totalorder %s42, %s43
      %p57 = scmp.eq.s32.totalorder %s21, 1
      %p58 = por %p56, %p57
      %p60 = scmp.ne.s32.totalorder %s43, %s59
      %p61 = scmp.eq.s32.totalorder %s21, 0
      %p62 = por %p60, %p61
      %s64 = sadd.s32 %s63, 1
      %p67 = scmp.eq.s32.totalorder %s15, 1
      %p68 = scmp.ne.s32.totalorder %s63, %s65
      %p69 = scmp.eq.s32.totalorder %s15, 0
      %p70 = por %p68, %p69
      %p71 = scmp.ne.s32.totalorder %s63, %s65
      %p72 = scmp.eq.s32.totalorder %s20, 1
      %p73 = por %p71, %p72
      %p74 = scmp.ne.s32.totalorder %s65, %s66
      %p75 = scmp.eq.s32.totalorder %s20, 0
      %p76 = por %p74, %p75
      %p77 = scmp.ne.s32.totalorder %s65, %s66
      %p78 = scmp.eq.s32.totalorder %s21, 1
      %p79 = por %p77, %p78
      %p81 = scmp.ne.s32.totalorder %s66, %s80
      %p82 = scmp.eq.s32.totalorder %s21, 0
      %p83 = por %p81, %p82
      %s85 = sadd.s32 %s84, 1
      %p88 = scmp.eq.s32.totalorder %s15, 1
      %p89 = scmp.ne.s32.totalorder %s84, %s86
      %p90 = scmp.eq.s32.totalorder %s15, 0
      %p91 = por %p89, %p90
      %p92 = scmp.ne.s32.totalorder %s84, %s86
      %p93 = scmp.eq.s32.totalorder %s20, 1
      %p94 = por %p92, %p93
      %p95 = scmp.ne.s32.totalorder %s86, %s87
      %p96 = scmp.eq.s32.totalorder %s20, 0
      %p97 = por %p95, %p96
      %p98 = scmp.ne.s32.totalorder %s86, %s87
      %p99 = scmp.eq.s32.totalorder %s21, 1
      %p100 = por %p98, %p99
      %p102 = scmp.ne.s32.totalorder %s87, %s101
      %p103 = scmp.eq.s32.totalorder %s21, 0
      %p104 = por %p102, %p103
      %s105 = ssub.s32 %s22, %s34
      %s106 = ssub.s32 %s23, %s30
      %s107 = sor.u32 %s105, %s106
      %p108 = scmp.eq.s32.totalorder %s107, 0
      %s110 = sadd.s32 %s109, 1
      %s111 = scalar_select %p108, %s109, %s110
      %p114 = pneg %p108
      %p115 = scmp.eq.s32.totalorder %s15, 1
      %p116 = por %p114, %p115
      %p117 = scmp.ne.s32.totalorder %s109, %s112
      %p118 = scmp.eq.s32.totalorder %s15, 0
      %p119 = por %p117, %p118
      %p120 = scmp.ne.s32.totalorder %s109, %s112
      %p121 = scmp.eq.s32.totalorder %s20, 1
      %p122 = por %p120, %p121
      %p123 = scmp.ne.s32.totalorder %s112, %s113
      %p124 = scmp.eq.s32.totalorder %s20, 0
      %p125 = por %p123, %p124
      %p126 = scmp.ne.s32.totalorder %s112, %s113
      %p127 = scmp.eq.s32.totalorder %s21, 1
      %p128 = por %p126, %p127
      %p130 = scmp.ne.s32.totalorder %s113, %s129
      %p131 = scmp.eq.s32.totalorder %s21, 0
      %p132 = por %p130, %p131
      %p133 = scmp.le.s32.totalorder 1, %s15
      %p134 = scmp.lt.s32.totalorder %s15, 3
      %p135 = pnand %p133, %p134
      %p136 = pneg %p135
      // Predicated region
      $region9: #{tpu_custom_call.1} parent=5 // pred_check
        _
      $region10: #{tpu_custom_call.1} parent=5 // pred_check_branch
        %138 = sbr.rel (%p135) target = $region12
      $region11: #{tpu_custom_call.1} parent=5 // pred_region
        %s139 = ssub.s32 %s15, 1
        // Predicated region
        $region13: #{tpu_custom_call.1} parent=11 // pred_check
          %p140 = pneg %p76
        $region14: #{tpu_custom_call.1} parent=11 // pred_check_branch
          %142 = sbr.rel (%p140) target = $region16
        $region15: #{tpu_custom_call.1} parent=11 // pred_region
          _
        $region16: #{tpu_custom_call.1} parent=11 // pred_fallthru
          _
        // Predicated region
        $region17: #{tpu_custom_call.1} parent=11 // pred_check
          %p143 = pneg %p97
        $region18: #{tpu_custom_call.1} parent=11 // pred_check_branch
          %145 = sbr.rel (%p143) target = $region20
        $region19: #{tpu_custom_call.1} parent=11 // pred_region
          _
        $region20: #{tpu_custom_call.1} parent=11 // pred_fallthru
          _
      $region12: #{tpu_custom_call.1} parent=5 // pred_fallthru
        _
      %p146 = scmp.lt.s32.totalorder %s15, 2
      // Predicated region
      $region21: #{tpu_custom_call.1} parent=5 // pred_check
        %p147 = pneg %p146
      $region22: #{tpu_custom_call.1} parent=5 // pred_check_branch
        %149 = sbr.rel (%p147) target = $region24
      $region23: #{tpu_custom_call.1} parent=5 // pred_region
        // Predicated region
        $region25: #{tpu_custom_call.1} parent=23 // pred_check
          %p150 = pneg %p49
        $region26: #{tpu_custom_call.1} parent=23 // pred_check_branch
          %152 = sbr.rel (%p150) target = $region28
        $region27: #{tpu_custom_call.1} parent=23 // pred_region
          %s153 = sand.u32 %s39, 1
          %s154 = scalar_lea.sflag [#allocation3], %s153
          %s155 = sand.u32 %s39, 1
          %s156 = smul.addr %s155, 8
          %s157 = scalar_lea.vmem [#allocation2], %s156
          %159 = vsyncadd %s154, 0
          %s160 = sadd.s32 %s23, %s22
          %s161 = smul.addr %s160, 8
          %s162 = scalar_lea.hbm %s0, %s161
          %s164 = sshll.u32 %s162, 4
          %s165 = int_to_ptr.hbm [resolvable:$true] %s164
          %s166 = sshll.u32 %s157, 4
          %s167 = int_to_ptr.vmem [resolvable:$true] %s166
          %169 = dma.hbm_to_vmem [thread:$0]  %s165, 128, %s167, %s154
        $region28: #{tpu_custom_call.1} parent=23 // pred_fallthru
          _
      $region24: #{tpu_custom_call.1} parent=5 // pred_fallthru
        _
      %p170 = scmp.le.s32.totalorder 1, %s15
      %p171 = scmp.lt.s32.totalorder %s15, 3
      %p172 = pnand %p170, %p171
      %p173 = pneg %p172
      // Predicated region
      $region29: #{tpu_custom_call.1} parent=5 // pred_check
        _
      $region30: #{tpu_custom_call.1} parent=5 // pred_check_branch
        %175 = sbr.rel (%p172) target = $region32
      $region31: #{tpu_custom_call.1} parent=5 // pred_region
        %s176 = ssub.s32 %s15, 1
        %s177 = sand.u32 %s42, 1
        %s178 = scalar_lea.sflag [#allocation3], %s177
        %s179 = sand.u32 %s42, 1
        %s180 = smul.addr %s179, 8
        %s181 = scalar_lea.vmem [#allocation2], %s180
        // Predicated region
        $region33: #{tpu_custom_call.1} parent=31 // pred_check
          %p182 = pneg %p55
        $region34: #{tpu_custom_call.1} parent=31 // pred_check_branch
          %184 = sbr.rel (%p182) target = $region36
        $region35: #{tpu_custom_call.1} parent=31 // pred_region
          %186 = dma.done %s178, 128
        $region36: #{tpu_custom_call.1} parent=31 // pred_fallthru
          _
        %s187 = sand.u32 %s42, 1
        %s188 = scalar_lea.sflag [#allocation3], %s187
        %s189 = sand.u32 %s42, 1
        %s190 = smul.addr %s189, 8
        %s191 = scalar_lea.vmem [#allocation2], %s190
        %p192 = pneg %p55
        %p193 = pneg %p52
        %p194 = pneg %p76
        %p195 = pneg %p73
        %p196 = pneg %p97
        %p197 = pneg %p94
        %p198 = pneg %p125
        %p199 = pneg %p122
        %s200 = sand.u32 %s112, 1
        %s201 = scalar_lea.sflag [#allocation4], %s200
        %s202 = sand.u32 %s112, 1
        %s203 = smul.addr %s202, 4
        %s204 = scalar_lea.vmem [#allocation5], %s203
        %v205 = vld [vmem:[%s1] sm:$0xf]
        %v206 = vld [vmem:[%s181] sm:$0xff]
        %v207 = vld [vmem:[%s2] sm:$0xf]
        %209 = vset.pattern.permute.xlu0 0
        %210 = vperm.xlu0 %209, %v207
        %v211 = vpop.permute.xlu0 %210
        %vm213 = vcmask 64512
        %v215 = vsel %vm213, %v205, 0
        %217 = vmatpush.msra.mxu0 0.0
        %218 = vmatpush.msra.mxu0 0.0
        %219 = vmatpush.msra.mxu0 0.0
        %220 = vmatpush.msra.mxu0 0.0
        %221 = vmatpush.msra.mxu0 0.0
        %222 = vmatpush.msra.mxu0 0.0
        %223 = vmatpush.msra.mxu0 0.0
        %224 = vmatpush.msra.mxu0 0.0
        %225 = vmatpush.msra.mxu0 0.0
        %226 = vmatpush.msra.mxu0 0.0
        %227 = vmatpush.msra.mxu0 0.0
        %228 = vmatpush.msra.mxu0 0.0
        %229 = vmatpush.msra.mxu0 0.0
        %230 = vmatpush.msra.mxu0 0.0
        %231 = vmatpush.msra.mxu0 0.0
        %232 = vmatpush.msra.mxu0 %v206
        %233 = vmatmul.f32.gmra.mxu0 %v215
        %v234 = vpop.f32.mrf.mxu0
        %v235 = vadd.f32 %v211, %v234
        %236 = vdwg.mxu0
        %v237 = vmax.f32 %v235, 0.0
        %vm238 = vcmask 125952
        %239 = vst.msk [vmem:[%s204] sm:$0xf] %vm238, %v237
        %s240 = sand.u32 %s112, 1
        %s241 = scalar_lea.sflag [#allocation4], %s240
        %s242 = sand.u32 %s112, 1
        %s243 = smul.addr %s242, 4
        %s244 = scalar_lea.vmem [#allocation5], %s243
        // Predicated region
        $region37: #{tpu_custom_call.1} parent=31 // pred_check
          %p245 = pneg %p122
        $region38: #{tpu_custom_call.1} parent=31 // pred_check_branch
          %247 = sbr.rel (%p245) target = $region40
        $region39: #{tpu_custom_call.1} parent=31 // pred_region
          %249 = vsyncadd %s241, 0
          %s250 = sadd.s32 %s25, %s24
          %s251 = smul.addr %s250, 4
          %s252 = scalar_lea.hbm %s3, %s251
          %s254 = sshll.u32 %s244, 4
          %s255 = int_to_ptr.vmem [resolvable:$true] %s254
          %s256 = sshll.u32 %s252, 4
          %s257 = int_to_ptr.hbm [resolvable:$true] %s256
          %259 = dma.vmem_to_hbm [thread:$0]  %s255, 64, %s257, %s241
        $region40: #{tpu_custom_call.1} parent=31 // pred_fallthru
          _
      $region32: #{tpu_custom_call.1} parent=5 // pred_fallthru
        _
      %p260 = scmp.le.s32.totalorder 2, %s15
      // Predicated region
      $region41: #{tpu_custom_call.1} parent=5 // pred_check
        %p261 = pneg %p260
      $region42: #{tpu_custom_call.1} parent=5 // pred_check_branch
        %263 = sbr.rel (%p261) target = $region44
      $region43: #{tpu_custom_call.1} parent=5 // pred_region
        %s264 = ssub.s32 %s15, 2
        // Predicated region
        $region45: #{tpu_custom_call.1} parent=43 // pred_check
          %p265 = pneg %p128
        $region46: #{tpu_custom_call.1} parent=43 // pred_check_branch
          %267 = sbr.rel (%p265) target = $region48
        $region47: #{tpu_custom_call.1} parent=43 // pred_region
          %s268 = sand.u32 %s113, 1
          %s269 = scalar_lea.sflag [#allocation4], %s268
          %s270 = sand.u32 %s113, 1
          %s271 = smul.addr %s270, 4
          %s272 = scalar_lea.vmem [#allocation5], %s271
          %274 = dma.done %s269, 64
        $region48: #{tpu_custom_call.1} parent=43 // pred_fallthru
          _
      $region44: #{tpu_custom_call.1} parent=5 // pred_fallthru
        _
    $region6: #{tpu_custom_call.1} parent=1 // loop_footer
      %s19 = sadd.s32 1, %s15
    $region7: #{tpu_custom_call.1} parent=1 // loop_footer_branch
      %14 = sbr.rel target = $region3
    $region8: #{tpu_custom_call.1} parent=1 // loop_exit
      _
    %275 = vsyncpa [#allocation3], 1
    %s276 = scalar_lea.sflag [#allocation3], 1
    %277 = vsyncpa %s276, 1
    %278 = vsyncpa [#allocation4], 1
    %s279 = scalar_lea.sflag [#allocation4], 1
    %280 = vsyncpa %s279, 1

</llo_original>
